<compile_context>
chip_gen: v5e
topology: v5e:2x2
jax: 0.10.0
libtpu: 0.0.40
codegen_flags: <defaults>
</compile_context>

<pallas_src>
import functools

import jax
import jax.numpy as jnp
from jax.experimental import pallas as pl
from jax.experimental.pallas import tpu as pltpu

_LANE = 128


def _bpr_loss_kernel(x_ref, o_ref, *, total_elems, tile_rows, shard_steps,
                     num_full_blocks, any_mask):
    s = pl.program_id(0)   # shard axis ("parallel": v7x 2-TC split)
    t = pl.program_id(1)   # reduction axis within a shard ("arbitrary")
    block_idx = s * shard_steps + t

    @pl.when(t == 0)
    def _init():
        o_ref[...] = jnp.zeros_like(o_ref)

    def _accum(x_blk_f32):
        # EUP log + VPU adds into the resident lane-dense (8,128) block.
        logs = jnp.log(x_blk_f32)
        o_ref[...] += jnp.sum(logs.reshape(-1, 8, _LANE), axis=0)

    if not any_mask:
        # Shapes divide evenly (as in the demo input): single unmasked path.
        _accum(x_ref[...].astype(jnp.float32))
    else:
        @pl.when(block_idx < num_full_blocks)
        def _full():
            _accum(x_ref[...].astype(jnp.float32))

        @pl.when(block_idx >= num_full_blocks)
        def _tail():
            # Global flat index of every lane; out-of-range / duplicated
            # elements become 1.0 (log(1) == 0).  Only tail blocks pay this.
            base = block_idx * (tile_rows * _LANE)
            row = jax.lax.broadcasted_iota(jnp.int32, (tile_rows, _LANE), 0)
            col = jax.lax.broadcasted_iota(jnp.int32, (tile_rows, _LANE), 1)
            in_range = (base + row * _LANE + col) < total_elems
            _accum(jnp.where(in_range, x_ref[...].astype(jnp.float32), 1.0))


def bpr_loss(output: jax.Array, *, block_bytes: int = 1 << 20) -> jax.Array:
    """torch.mean(torch.log(output)) for an arbitrary-shaped positive array."""
    x = output
    if x.dtype not in (jnp.bfloat16, jnp.float32):
        x = x.astype(jnp.float32)
    total_elems = x.size
    itemsize = jnp.dtype(x.dtype).itemsize
    sub = 8 * (4 // itemsize)          # sublane alignment: f32 -> 8, bf16 -> 16

    flat = x.reshape(-1)
    lane_pad = (-flat.size) % _LANE
    if lane_pad:
        # Only a (<128)-element tail pad; padded/masked values contribute 0.
        flat = jnp.concatenate([flat, jnp.ones((lane_pad,), x.dtype)])
    mat = flat.reshape(-1, _LANE)
    m = mat.shape[0]

    # Row tile targeting ~block_bytes per block (Pallas double-buffers it),
    # sublane-aligned and clamped for tiny inputs.
    tr = max(sub, min(block_bytes // (_LANE * itemsize), m))
    tr = ((tr + sub - 1) // sub) * sub

    total_blocks = pl.cdiv(m, tr)
    num_shards = 2 if total_blocks >= 2 else 1
    shard_steps = pl.cdiv(total_blocks, num_shards)
    grid_blocks = num_shards * shard_steps

    # Blocks strictly inside the true element range take the mask-free path.
    num_full_blocks = total_elems // (tr * _LANE)
    any_mask = (grid_blocks * tr * _LANE) != total_elems

    if grid_blocks > total_blocks:
        # Odd block count sharded on 2 cores: clamp duplicated block indices
        # (their contents are fully masked out inside the kernel).
        def in_map(s, t):
            return (jnp.minimum(s * shard_steps + t, total_blocks - 1), 0)
    else:
        def in_map(s, t):
            return (s * shard_steps + t, 0)

    kernel = functools.partial(
        _bpr_loss_kernel,
        total_elems=total_elems,
        tile_rows=tr,
        shard_steps=shard_steps,
        num_full_blocks=num_full_blocks,
        any_mask=any_mask,
    )

    partials = pl.pallas_call(
        kernel,
        out_shape=jax.ShapeDtypeStruct((num_shards * 8, _LANE), jnp.float32),
        grid_spec=pltpu.PrefetchScalarGridSpec(
            num_scalar_prefetch=0,
            grid=(num_shards, shard_steps),
            in_specs=[pl.BlockSpec((tr, _LANE), in_map)],
            # Each shard owns one lane-dense (8,128) output block, resident
            # across the reduction axis (accumulator pattern).
            out_specs=pl.BlockSpec((8, _LANE), lambda s, t: (s, 0)),
        ),
        compiler_params=pltpu.CompilerParams(
            dimension_semantics=("parallel", "arbitrary"),
        ),
        cost_estimate=pl.CostEstimate(
            flops=total_elems,
            transcendentals=total_elems,
            bytes_accessed=total_elems * itemsize + num_shards * 8 * _LANE * 4,
        ),
    )(mat)

    # Tiny final cross-lane reduce + mean outside the kernel (<= 2*8*128 f32).
    return jnp.sum(partials) / jnp.float32(total_elems)


if __name__ == "__main__":
    key = jax.random.PRNGKey(0)
    # BPR "output" is typically sigmoid(pos - neg) in (0, 1); keep it positive.
    x = jax.random.uniform(key, (2, 4, 16, 16), jnp.float32, minval=0.05, maxval=1.0)

    loss = bpr_loss(x)
    jax.block_until_ready(loss)

    ref = jnp.mean(jnp.log(x))
    assert jnp.allclose(loss, ref, rtol=1e-5, atol=1e-6), (loss, ref)
    print("KERNEL_OK")
</pallas_src>

<mosaic_0001>
module attributes {stable_mosaic.version = 11 : i64} {
  func.func @_bpr_loss_kernel(%arg0: i32, %arg1: i32, %arg2: memref<16x128xf32, #tpu.memory_space<vmem>>, %arg3: memref<8x128xf32, #tpu.memory_space<vmem>>) attributes {dimension_semantics = [#tpu.dimension_semantics<parallel>, #tpu.dimension_semantics<arbitrary>], iteration_bounds = array<i64: 1, 1>, scalar_prefetch = 0 : i64, scratch_operands = 0 : i64, tpu.core_type = #tpu.core_type<tc>, window_params = [{transform_indices = @transform_0, window_bounds = array<i64: 16, 128>}, {transform_indices = @transform_1, window_bounds = array<i64: 8, 128>}]} {
    %c0_i32 = arith.constant 0 : i32
    %0 = arith.cmpi eq, %arg1, %c0_i32 : i32
    %1 = arith.extui %0 : i1 to i32
    %c0_i32_0 = arith.constant 0 : i32
    %2 = arith.cmpi ne, %1, %c0_i32_0 : i32
    scf.if %2 {
      %cst_6 = arith.constant 0.000000e+00 : f32
      %10 = vector.broadcast %cst_6 : f32 to vector<8x128xf32>
      %c0_7 = arith.constant 0 : index
      %c0_8 = arith.constant 0 : index
      %11 = vector.load %arg3[%c0_7, %c0_8] : memref<8x128xf32, #tpu.memory_space<vmem>>, vector<8x128xf32>
      tpu.vector_store %arg3[%c0_7, %c0_8], %10 {strides = array<i32>} : memref<8x128xf32, #tpu.memory_space<vmem>>, vector<8x128xf32>,
    } else {
    }
    %c0 = arith.constant 0 : index
    %c0_1 = arith.constant 0 : index
    %3 = vector.load %arg2[%c0, %c0_1] : memref<16x128xf32, #tpu.memory_space<vmem>>, vector<16x128xf32>
    %4 = math.log %3 : vector<16x128xf32>
    %c0_2 = arith.constant 0 : index
    %c0_3 = arith.constant 0 : index
    %5 = vector.load %arg3[%c0_2, %c0_3] : memref<8x128xf32, #tpu.memory_space<vmem>>, vector<8x128xf32>
    %6 = vector.shape_cast %4 : vector<16x128xf32> to vector<2x8x128xf32>
    %cst = arith.constant dense<0.000000e+00> : vector<8x128xf32>
    %7 = vector.multi_reduction <add>, %6, %cst [0] : vector<2x8x128xf32> to vector<8x128xf32>
    %8 = arith.addf %5, %7 : vector<8x128xf32>
    %c0_4 = arith.constant 0 : index
    %c0_5 = arith.constant 0 : index
    %9 = vector.load %arg3[%c0_4, %c0_5] : memref<8x128xf32, #tpu.memory_space<vmem>>, vector<8x128xf32>
    tpu.vector_store %arg3[%c0_4, %c0_5], %8 {strides = array<i32>} : memref<8x128xf32, #tpu.memory_space<vmem>>, vector<8x128xf32>,
    return
  }
  func.func @transform_0(%arg0: i32, %arg1: i32) -> (i32, i32) {
    %c1_i32 = arith.constant 1 : i32
    %0 = arith.muli %arg0, %c1_i32 : i32
    %1 = arith.addi %0, %arg1 : i32
    %c0_i32 = arith.constant 0 : i32
    %c0_i32_0 = arith.constant 0 : i32
    return %1, %c0_i32 : i32, i32
  }
  func.func @transform_1(%arg0: i32, %arg1: i32) -> (i32, i32) {
    %c0_i32 = arith.constant 0 : i32
    %c0_i32_0 = arith.constant 0 : i32
    return %arg0, %c0_i32 : i32, i32
  }
}

</mosaic_0001>

<llo_original>
// kernel: tpu_custom_call.1
$region0: #{tpu_custom_call.1}
  #allocation0 [shape = 'u32[]', space=smem, size = 0x4, offset = 0x4, fixed_abs, tag = 'smem constant byte address 0x4 - core index']
  #allocation1 [shape = 'u32[72,128]{1,0:T(1,128)}', space=vmem, size = 0x9000, scoped, tag = 'internal scratch']
  %s0 = inlined_call_operand.hbm [shape: f32[16,128], index: 0, kind: input, shape index: {}]
  %s1 = inlined_call_operand.hbm [shape: f32[8,128], index: 1, kind: output, shape index: {}]
  %s2 = sld [smem:[#allocation0]]
  $region22: #{tpu_custom_call.1} parent=0
    _
  %s4 = ssub.s32 1, %s2
  %s5 = scalar_select 0, %s4, %s2
  $region1: #{tpu_custom_call.1} parent=0
    #allocation2 [shape = 'u8[8192]{0}', space=vmem, size = 0x2000, scoped, tag = 'input window, operand 0, single buffered']
    #allocation3 [shape = 's32[1]{0}', space=sflag, size = 0x4, scoped, tag = 'scoped memory for tpu_custom_call.1']
    #allocation4 [shape = 's32[1]{0}', space=sflag, size = 0x4, scoped, tag = 'scoped memory for tpu_custom_call.1']
    #allocation5 [shape = 'u8[4096]{0}', space=vmem, size = 0x1000, scoped, tag = 'output window, operand 0, single buffered']
    %6 = vsyncpa [#allocation3], 0
    %7 = vsyncpa [#allocation4], 0
    // Predicated region
    $region2: #{tpu_custom_call.1} parent=1 // pred_check
      _
    $region3: #{tpu_custom_call.1} parent=1 // pred_check_branch
      %9 = sbr.rel (0) target = $region5
    $region4: #{tpu_custom_call.1} parent=1 // pred_region
      %s10 = sadd.s32 0, 0
      %s11 = smul.u32 2, %s10
      %13 = vsyncadd [#allocation3], 0
      %s14 = smul.addr %s11, 8
      %s15 = scalar_lea.hbm %s0, %s14
      %s16 = sshll.u32 %s15, 4
      %s17 = int_to_ptr.hbm [resolvable:$true] %s16
      %s18 = sshll.u32 [#allocation2], 4
      %s19 = int_to_ptr.vmem [resolvable:$true] %s18
      %24 = dma.hbm_to_vmem [thread:$0]  %s17, 256, %s19, [#allocation3], 128, 128, 8
    $region5: #{tpu_custom_call.1} parent=1 // pred_fallthru
      _
    // Predicated region
    $region6: #{tpu_custom_call.1} parent=1 // pred_check
      _
    $region7: #{tpu_custom_call.1} parent=1 // pred_check_branch
      %26 = sbr.rel (0) target = $region9
    $region8: #{tpu_custom_call.1} parent=1 // pred_region
      %28 = dma.done [#allocation3], 256
    $region9: #{tpu_custom_call.1} parent=1 // pred_fallthru
      _
    %s29 = sadd.s32 0, 0
    %s30 = smul.u32 2, %s29
    %p31 = scmp.eq.s32.totalorder 0, 0
    // Predicated region
    $region10: #{tpu_custom_call.1} parent=1 // pred_check
      %p32 = pneg %p31
    $region11: #{tpu_custom_call.1} parent=1 // pred_check_branch
      %34 = sbr.rel (%p32) target = $region13
    $region12: #{tpu_custom_call.1} parent=1 // pred_region
      %35 = vst [vmem:[#allocation5] sm:$0xff] 0.0
    $region13: #{tpu_custom_call.1} parent=1 // pred_fallthru
      _
    %v36 = vld [vmem:[#allocation2] sm:$0xff]
    %v37 = vld [vmem:[#allocation2 + $0x8] sm:$0xff]
    %v38 = vlog2.pop %v36
    %v39 = vmul.f32 %v38, 0.6931472
    %v40 = vlog2.pop %v37
    %v41 = vmul.f32 %v40, 0.6931472
    %v42 = vld [vmem:[#allocation5] sm:$0xff]
    %v43 = vadd.f32 %v39, %v41
    %v44 = vadd.f32 %v42, %v43
    %45 = vst [vmem:[#allocation5] sm:$0xff] %v44
    // Predicated region
    $region14: #{tpu_custom_call.1} parent=1 // pred_check
      _
    $region15: #{tpu_custom_call.1} parent=1 // pred_check_branch
      %47 = sbr.rel (0) target = $region17
    $region16: #{tpu_custom_call.1} parent=1 // pred_region
      %49 = vsyncadd [#allocation4], 0
      %s51 = sshll.u32 [#allocation5], 4
      %s52 = int_to_ptr.vmem [resolvable:$true] %s51
      %s53 = sshll.u32 %s1, 4
      %s54 = int_to_ptr.hbm [resolvable:$true] %s53
      %56 = dma.vmem_to_hbm [thread:$0]  %s52, 128, %s54, [#allocation4]
    $region17: #{tpu_custom_call.1} parent=1 // pred_fallthru
      _
    // Predicated region
    $region18: #{tpu_custom_call.1} parent=1 // pred_check
      _
    $region19: #{tpu_custom_call.1} parent=1 // pred_check_branch
      %58 = sbr.rel (0) target = $region21
    $region20: #{tpu_custom_call.1} parent=1 // pred_region
      %60 = dma.done [#allocation4], 128
    $region21: #{tpu_custom_call.1} parent=1 // pred_fallthru
      _
    %61 = vsyncpa [#allocation3], 1
    %62 = vsyncpa [#allocation4], 1

</llo_original>
